<compile_context>
chip_gen: v7x
topology: tpu7x:2x2x1
jax: 0.10.0
libtpu: 0.0.40
codegen_flags: <defaults>
</compile_context>

<pallas_src>
import functools

import jax
import jax.numpy as jnp
from jax.experimental import pallas as pl
from jax.experimental.pallas import tpu as pltpu


# ----------------------------- parameter-prep helpers (plain JAX glue) -------------------------

def _round_up(x, m):
    return ((x + m - 1) // m) * m


def _quant_weight(weight, n_weight):
    """Quant(N_weight, running=False): per-tensor symmetric max-abs quant (saturating)."""
    levels = float(2 ** (n_weight - 1) - 1)
    scale = jnp.maximum(jnp.max(jnp.abs(weight)), 1e-8)
    codes = jnp.clip(jnp.round(weight / scale * levels), -levels, levels)
    return codes * (scale / levels)


def calibrate_running_range(x, weight, noise, *, n_weight=4, array_size=32):
    """One-off stand-in for the momentum-tracked `running_range` buffer of Quant(N_ADC,
    running=True).  Demo/training glue only -- the forward below takes the buffer as an argument
    and never re-runs the sepMM in XLA."""
    w_eff = _quant_weight(weight, n_weight) + noise
    B, in_f = x.shape
    out_f = weight.shape[0]
    nc = in_f // array_size
    xc = x.reshape(B, nc, array_size)
    wc = w_eff.reshape(out_f, nc, array_size)
    partials = jnp.einsum("bca,oca->cbo", xc, wc)
    return jnp.max(jnp.abs(partials))


def _choose_pack(num_chunks, array_size):
    """Pack chunks so the packed contraction depth is 128 lanes (one MXU depth on every TPU
    generation): pack=4 for array_size=32.  Deliberately NOT 256-deep: the MXU tile count along N
    is unchanged for out_f >= 64, while weight DMA, the code accumulator and the per-step
    VPU/store traffic all scale linearly with pack (and v5e's MXU is only 128 deep)."""
    limit = max(1, 128 // array_size)
    for p in range(min(limit, num_chunks), 0, -1):
        if num_chunks % p == 0 and (p * array_size) % 128 == 0:
            return p
    # No 128-lane-aligned packing exists.  Tiny layers: a single full-width group (full-dim blocks
    # are exempt from the (8,128) BlockSpec rule) keeps everything small and aligned.
    if num_chunks * array_size <= 512 and num_chunks <= 16:
        return num_chunks
    # TODO(synk): pad in_f up to a 128-lane multiple of array_size chunks for these layouts.
    raise NotImplementedError(
        "in_features / array_size combination needs lane padding (not implemented)")


def _prepare_operands(x, weight, bias, noise, running_range, *, n_weight, n_adc, array_size):
    """Build the dense, chunk-major, pre-transposed bf16 operands shared by kernel & reference."""
    B, in_f = x.shape
    out_f = weight.shape[0]
    assert in_f % array_size == 0, "in_features must be a multiple of array_size"
    num_chunks = in_f // array_size
    pack = _choose_pack(num_chunks, array_size)
    num_groups = num_chunks // pack
    k_group = pack * array_size

    # Effective (quantized + noisy) weight, dense per group: (num_groups, k_group, out_f).
    # The block-diagonal layout the MXU needs is built on-chip -- never materialized in HBM.
    w_eff = _quant_weight(weight, n_weight) + noise
    w_dense = w_eff.reshape(out_f, num_groups, k_group).transpose(1, 2, 0).astype(jnp.bfloat16)

    levels = float(2 ** (n_adc - 1) - 1)
    rr = jnp.maximum(jnp.asarray(running_range, jnp.float32).reshape(()), 1e-8)  # epsilon guard
    scales = jnp.stack([levels / rr, rr / levels]).astype(jnp.float32)           # [q, deq]

    # Static fold matrix: sums the `pack` per-chunk lane groups with one exact MXU matmul
    # (integer-valued f32 codes), avoiding sub-128-lane slicing in finalize.
    fold = jnp.tile(jnp.eye(out_f, dtype=jnp.float32), (pack, 1))                # (pack*out_f, out_f)

    x_bf = x.astype(jnp.bfloat16)
    bias2d = bias.reshape(1, out_f).astype(jnp.float32)

    meta = dict(B=B, in_f=in_f, out_f=out_f, pack=pack, num_groups=num_groups,
                k_group=k_group, levels=levels)
    return x_bf, w_dense, bias2d, fold, scales, meta


# ----------------------------------- Pallas kernel ---------------------------------------------

def _cross_linear_kernel(scales_ref, x_ref, w_ref, b_ref, fold_ref, o_ref,
                         w_diag_ref, acc_ref, *, levels, pack, array_size, out_f):
    """Grid = (batch tiles, chunk groups).  Per step: place the dense weight block's diagonal
    sub-blocks into the persistent VMEM block-diagonal scratch, one full-depth MXU matmul, one VPU
    ADC-quant pass; integer codes accumulate in VMEM; dequant + fold + bias at the last group."""
    g = pl.program_id(1)

    @pl.when(g == 0)
    def _init():
        acc_ref[...] = jnp.zeros_like(acc_ref)
        # Off-diagonal entries are never written afterwards; diagonal slots are overwritten
        # every group, so this zero-fill is once per batch tile (cheap, megacore-safe).
        w_diag_ref[...] = jnp.zeros_like(w_diag_ref)

    # Dense -> block-diagonal placement (on-chip; saves pack x weight HBM traffic).
    for p in range(pack):
        r0 = p * array_size
        c0 = p * out_f
        w_diag_ref[r0:r0 + array_size, c0:c0 + out_f] = w_ref[r0:r0 + array_size, :]

    # (tb, k_group) x (k_group, pack*out_f) -> (tb, pack*out_f), f32 accumulate on the MXU.
    partial = jnp.dot(x_ref[...], w_diag_ref[...], preferred_element_type=jnp.float32)

    # Saturating ADC quantization of all `pack` chunk partials in one pass; accumulate codes.
    q_scale = scales_ref[0]
    acc_ref[...] += jnp.clip(jnp.round(partial * q_scale), -levels, levels)

    @pl.when(g == pl.num_programs(1) - 1)
    def _finalize():
        deq_scale = scales_ref[1]
        # Fold the pack lane groups down to out_f lanes with one exact MXU matmul.
        summed = jnp.dot(acc_ref[...], fold_ref[...], preferred_element_type=jnp.float32)
        o_ref[...] = summed * deq_scale + b_ref[...]


# --------------------------------------- wrapper ------------------------------------------------

def cross_linear_forward(x, weight, bias, noise, running_range, *,
                         n_weight=4, n_adc=4, array_size=32, batch_tile=512):
    """Eval-mode CrossLinear forward.  `running_range` is the (pre-trained) ADC quant buffer."""
    x_bf, w_dense, bias2d, fold, scales, meta = _prepare_operands(
        x, weight, bias, noise, running_range,
        n_weight=n_weight, n_adc=n_adc, array_size=array_size)

    B, out_f = meta["B"], meta["out_f"]
    pack, num_groups, k_group = meta["pack"], meta["num_groups"], meta["k_group"]

    # cdiv-based batch tiling with a zero-padded ragged tail; large tiles amortize per-step
    # overhead and the per-batch-tile re-streaming of the weights.
    nbt = max(1, -(-B // batch_tile))
    tb = _round_up(-(-B // nbt), 8)
    b_pad = nbt * tb
    if b_pad != B:
        x_bf = jnp.pad(x_bf, ((0, b_pad - B), (0, 0)))

    # VMEM budget (double-buffered ins/outs + persistent scratch), capped with headroom
    # against v7x's 64 MiB physical VMEM.
    est = (2 * tb * k_group * 2 + 2 * k_group * out_f * 2 + 2 * pack * out_f * out_f * 4 +
           k_group * pack * out_f * 2 + tb * pack * out_f * 4 + 2 * tb * out_f * 4 + out_f * 8)
    vmem_limit = int(min(max(4 * est, 32 << 20), 48 << 20))

    kernel = functools.partial(_cross_linear_kernel, levels=meta["levels"],
                               pack=pack, array_size=array_size, out_f=out_f)

    out = pl.pallas_call(
        kernel,
        out_shape=jax.ShapeDtypeStruct((b_pad, out_f), jnp.float32),
        grid_spec=pltpu.PrefetchScalarGridSpec(
            num_scalar_prefetch=1,                               # [q_scale, deq_scale] -> SMEM
            grid=(nbt, num_groups),
            in_specs=[
                pl.BlockSpec((tb, k_group), lambda i, g, s: (i, g)),              # x (bf16)
                pl.BlockSpec((None, k_group, out_f), lambda i, g, s: (g, 0, 0)),  # dense weight
                pl.BlockSpec((1, out_f), lambda i, g, s: (0, 0)),                 # bias (f32)
                pl.BlockSpec((pack * out_f, out_f), lambda i, g, s: (0, 0)),      # fold (f32)
            ],
            out_specs=pl.BlockSpec((tb, out_f), lambda i, g, s: (i, 0)),
            scratch_shapes=[
                pltpu.VMEM((k_group, pack * out_f), jnp.bfloat16),  # block-diag weight staging
                pltpu.VMEM((tb, pack * out_f), jnp.float32),        # ADC code accumulator
            ],
        ),
        compiler_params=pltpu.CompilerParams(
            dimension_semantics=("parallel", "arbitrary"),
            vmem_limit_bytes=vmem_limit),
    )(scales, x_bf, w_dense, bias2d, fold)
    return out[:B]


# ----------------------------- pure-JAX reference (same math path) -----------------------------

def cross_linear_reference(x, weight, bias, noise, running_range, *,
                           n_weight=4, n_adc=4, array_size=32):
    x_bf, w_dense, bias2d, fold, scales, meta = _prepare_operands(
        x, weight, bias, noise, running_range,
        n_weight=n_weight, n_adc=n_adc, array_size=array_size)
    B, out_f = meta["B"], meta["out_f"]
    pack, num_groups, k_group, levels = (meta["pack"], meta["num_groups"],
                                         meta["k_group"], meta["levels"])
    q_scale, deq_scale = scales[0], scales[1]

    acc = jnp.zeros((B, pack * out_f), jnp.float32)
    for g in range(num_groups):
        xg = x_bf[:, g * k_group:(g + 1) * k_group]
        # Same block-diagonal contraction the kernel performs.
        w_bd = jnp.zeros((k_group, pack * out_f), jnp.bfloat16)
        for p in range(pack):
            w_bd = w_bd.at[p * array_size:(p + 1) * array_size,
                           p * out_f:(p + 1) * out_f].set(
                w_dense[g, p * array_size:(p + 1) * array_size, :])
        partial = jnp.dot(xg, w_bd, preferred_element_type=jnp.float32)
        acc = acc + jnp.clip(jnp.round(partial * q_scale), -levels, levels)
    summed = jnp.dot(acc, fold, preferred_element_type=jnp.float32)
    return summed * deq_scale + bias2d


# ------------------------------------------ main ------------------------------------------------

if __name__ == "__main__":
    def run_case(key, B, in_f, out_f, *, with_noise, n_weight=4, n_adc=4, array_size=32):
        kx, kw, kb, kn = jax.random.split(key, 4)
        bound = 1.0 / (in_f ** 0.5)
        weight = jax.random.uniform(kw, (out_f, in_f), jnp.float32, -bound, bound)
        bias = jax.random.uniform(kb, (out_f,), jnp.float32, -bound, bound)
        if with_noise:
            noise = 0.01 * bound * jax.random.normal(kn, (out_f, in_f), jnp.float32)
        else:
            noise = jnp.zeros((out_f, in_f), jnp.float32)      # clear_noise()
        x = jax.random.normal(kx, (B, in_f), jnp.float32)

        # Stand-in for the trained running_range buffer (momentum-tracked during PyTorch training).
        rr = calibrate_running_range(x, weight, noise, n_weight=n_weight, array_size=array_size)

        y = cross_linear_forward(x, weight, bias, noise, rr,
                                 n_weight=n_weight, n_adc=n_adc, array_size=array_size)
        y = jax.block_until_ready(y)
        y_ref = cross_linear_reference(x, weight, bias, noise, rr,
                                       n_weight=n_weight, n_adc=n_adc, array_size=array_size)
        assert y.shape == (B, out_f)
        err = float(jnp.max(jnp.abs(y - y_ref)))
        assert jnp.allclose(y, y_ref, atol=1e-3, rtol=1e-3), (
            f"mismatch (B={B}, in={in_f}, out={out_f}): max abs err {err}")

    root = jax.random.PRNGKey(0)
    k1, k2 = jax.random.split(root)
    # Shapes consistent with the module defaults (nn.Linear(in, out), array_size=32).
    run_case(k1, B=8, in_f=64, out_f=32, with_noise=False)   # 2 chunks -> one group, one grid step
    run_case(k2, B=16, in_f=512, out_f=64, with_noise=True)  # 16 chunks -> pack=4, 4-group reduce
    print("KERNEL_OK")
</pallas_src>

<mosaic_0001>
module attributes {stable_mosaic.version = 11 : i64} {
  func.func @_cross_linear_kernel(%arg0: i32, %arg1: i32, %arg2: memref<2xf32, #tpu.memory_space<smem>>, %arg3: memref<8x64xbf16, #tpu.memory_space<vmem>>, %arg4: memref<1x64x32xbf16, #tpu.memory_space<vmem>>, %arg5: memref<1x32xf32, #tpu.memory_space<vmem>>, %arg6: memref<64x32xf32, #tpu.memory_space<vmem>>, %arg7: memref<8x32xf32, #tpu.memory_space<vmem>>, %arg8: memref<64x64xbf16, #tpu.memory_space<vmem>>, %arg9: memref<8x64xf32, #tpu.memory_space<vmem>>) attributes {dimension_semantics = [#tpu.dimension_semantics<parallel>, #tpu.dimension_semantics<arbitrary>], iteration_bounds = array<i64: 1, 1>, scalar_prefetch = 1 : i64, scratch_operands = 2 : i64, tpu.core_type = #tpu.core_type<tc>, window_params = [{transform_indices = @transform_0, window_bounds = array<i64: 8, 64>}, {transform_indices = @transform_1, window_bounds = array<i64: 1, 64, 32>}, {pipeline_mode = #tpu.pipeline_mode<synchronous>, transform_indices = @transform_2, window_bounds = array<i64: 1, 32>}, {pipeline_mode = #tpu.pipeline_mode<synchronous>, transform_indices = @transform_3, window_bounds = array<i64: 64, 32>}, {transform_indices = @transform_4, window_bounds = array<i64: 8, 32>}]} {
    %c0_i32 = arith.constant 0 : i32
    %0 = arith.cmpi eq, %arg1, %c0_i32 : i32
    %1 = arith.extui %0 : i1 to i32
    %c0_i32_0 = arith.constant 0 : i32
    %2 = arith.cmpi ne, %1, %c0_i32_0 : i32
    scf.if %2 {
      %cst_22 = arith.constant 0.000000e+00 : f32
      %26 = vector.broadcast %cst_22 : f32 to vector<8x64xf32>
      %c0_23 = arith.constant 0 : index
      %c0_24 = arith.constant 0 : index
      %27 = vector.load %arg9[%c0_23, %c0_24] : memref<8x64xf32, #tpu.memory_space<vmem>>, vector<8x64xf32>
      tpu.vector_store %arg9[%c0_23, %c0_24], %26 {strides = array<i32>} : memref<8x64xf32, #tpu.memory_space<vmem>>, vector<8x64xf32>,
      %cst_25 = arith.constant 0.000000e+00 : bf16
      %28 = vector.broadcast %cst_25 : bf16 to vector<64x64xbf16>
      %c0_26 = arith.constant 0 : index
      %c0_27 = arith.constant 0 : index
      %29 = vector.load %arg8[%c0_26, %c0_27] : memref<64x64xbf16, #tpu.memory_space<vmem>>, vector<64x64xbf16>
      tpu.vector_store %arg8[%c0_26, %c0_27], %28 {strides = array<i32>} : memref<64x64xbf16, #tpu.memory_space<vmem>>, vector<64x64xbf16>,
    } else {
    }
    %c0 = arith.constant 0 : index
    %c0_1 = arith.constant 0 : index
    %c0_2 = arith.constant 0 : index
    %3 = vector.load %arg4[%c0, %c0_1, %c0_2] : memref<1x64x32xbf16, #tpu.memory_space<vmem>>, vector<1x32x32xbf16>
    %4 = vector.shape_cast %3 : vector<1x32x32xbf16> to vector<32x32xbf16>
    %c0_3 = arith.constant 0 : index
    %c0_4 = arith.constant 0 : index
    %5 = vector.load %arg8[%c0_3, %c0_4] : memref<64x64xbf16, #tpu.memory_space<vmem>>, vector<32x32xbf16>
    tpu.vector_store %arg8[%c0_3, %c0_4], %4 {strides = array<i32>} : memref<64x64xbf16, #tpu.memory_space<vmem>>, vector<32x32xbf16>,
    %c0_5 = arith.constant 0 : index
    %c32 = arith.constant 32 : index
    %c0_6 = arith.constant 0 : index
    %6 = vector.load %arg4[%c0_5, %c32, %c0_6] : memref<1x64x32xbf16, #tpu.memory_space<vmem>>, vector<1x32x32xbf16>
    %7 = vector.shape_cast %6 : vector<1x32x32xbf16> to vector<32x32xbf16>
    %c32_7 = arith.constant 32 : index
    %c32_8 = arith.constant 32 : index
    %8 = vector.load %arg8[%c32_7, %c32_8] : memref<64x64xbf16, #tpu.memory_space<vmem>>, vector<32x32xbf16>
    tpu.vector_store %arg8[%c32_7, %c32_8], %7 {strides = array<i32>} : memref<64x64xbf16, #tpu.memory_space<vmem>>, vector<32x32xbf16>,
    %c0_9 = arith.constant 0 : index
    %c0_10 = arith.constant 0 : index
    %9 = vector.load %arg3[%c0_9, %c0_10] : memref<8x64xbf16, #tpu.memory_space<vmem>>, vector<8x64xbf16>
    %c0_11 = arith.constant 0 : index
    %c0_12 = arith.constant 0 : index
    %10 = vector.load %arg8[%c0_11, %c0_12] : memref<64x64xbf16, #tpu.memory_space<vmem>>, vector<64x64xbf16>
    %cst = arith.constant dense<0.000000e+00> : vector<8x64xf32>
    %11 = tpu.matmul %9, %10, %cst {dimension_numbers = #tpu.dot_dimension_numbers<[1], [0], [0], [1], [0, 0, 1, 1], [], []>} : vector<8x64xbf16>, vector<64x64xbf16>, vector<8x64xf32> -> vector<8x64xf32>
    %c0_13 = arith.constant 0 : index
    %12 = memref.load %arg2[%c0_13] : memref<2xf32, #tpu.memory_space<smem>>
    %c0_14 = arith.constant 0 : index
    %c0_15 = arith.constant 0 : index
    %13 = vector.load %arg9[%c0_14, %c0_15] : memref<8x64xf32, #tpu.memory_space<vmem>>, vector<8x64xf32>
    %14 = vector.broadcast %12 : f32 to vector<8x64xf32>
    %15 = arith.mulf %11, %14 : vector<8x64xf32>
    %16 = math.roundeven %15 : vector<8x64xf32>
    %cst_16 = arith.constant -7.000000e+00 : f32
    %cst_17 = arith.constant 7.000000e+00 : f32
    %17 = vector.broadcast %cst_16 : f32 to vector<8x64xf32>
    %18 = arith.maximumf %17, %16 : vector<8x64xf32>
    %19 = vector.broadcast %cst_17 : f32 to vector<8x64xf32>
    %20 = arith.minimumf %19, %18 : vector<8x64xf32>
    %21 = arith.addf %13, %20 : vector<8x64xf32>
    %c0_18 = arith.constant 0 : index
    %c0_19 = arith.constant 0 : index
    %22 = vector.load %arg9[%c0_18, %c0_19] : memref<8x64xf32, #tpu.memory_space<vmem>>, vector<8x64xf32>
    tpu.vector_store %arg9[%c0_18, %c0_19], %21 {strides = array<i32>} : memref<8x64xf32, #tpu.memory_space<vmem>>, vector<8x64xf32>,
    %c0_i32_20 = arith.constant 0 : i32
    %23 = arith.cmpi eq, %arg1, %c0_i32_20 : i32
    %24 = arith.extui %23 : i1 to i32
    %c0_i32_21 = arith.constant 0 : i32
    %25 = arith.cmpi ne, %24, %c0_i32_21 : i32
    scf.if %25 {
      %c1 = arith.constant 1 : index
      %26 = memref.load %arg2[%c1] : memref<2xf32, #tpu.memory_space<smem>>
      %c0_22 = arith.constant 0 : index
      %c0_23 = arith.constant 0 : index
      %27 = vector.load %arg9[%c0_22, %c0_23] : memref<8x64xf32, #tpu.memory_space<vmem>>, vector<8x64xf32>
      %c0_24 = arith.constant 0 : index
      %c0_25 = arith.constant 0 : index
      %28 = vector.load %arg6[%c0_24, %c0_25] : memref<64x32xf32, #tpu.memory_space<vmem>>, vector<64x32xf32>
      %cst_26 = arith.constant dense<0.000000e+00> : vector<8x32xf32>
      %29 = tpu.matmul %27, %28, %cst_26 {dimension_numbers = #tpu.dot_dimension_numbers<[1], [0], [0], [1], [0, 0, 1, 1], [], []>} : vector<8x64xf32>, vector<64x32xf32>, vector<8x32xf32> -> vector<8x32xf32>
      %30 = vector.broadcast %26 : f32 to vector<8x32xf32>
      %31 = arith.mulf %29, %30 : vector<8x32xf32>
      %c0_27 = arith.constant 0 : index
      %c0_28 = arith.constant 0 : index
      %32 = vector.load %arg5[%c0_27, %c0_28] : memref<1x32xf32, #tpu.memory_space<vmem>>, vector<1x32xf32>
      %33 = vector.broadcast %32 : vector<1x32xf32> to vector<8x32xf32>
      %34 = arith.addf %31, %33 : vector<8x32xf32>
      %c0_29 = arith.constant 0 : index
      %c0_30 = arith.constant 0 : index
      %35 = vector.load %arg7[%c0_29, %c0_30] : memref<8x32xf32, #tpu.memory_space<vmem>>, vector<8x32xf32>
      tpu.vector_store %arg7[%c0_29, %c0_30], %34 {strides = array<i32>} : memref<8x32xf32, #tpu.memory_space<vmem>>, vector<8x32xf32>,
    } else {
    }
    return
  }
  func.func @transform_0(%arg0: i32, %arg1: i32, %arg2: memref<2xf32, #tpu.memory_space<smem>>) -> (i32, i32) {
    %c0_i32 = arith.constant 0 : i32
    return %arg0, %arg1 : i32, i32
  }
  func.func @transform_1(%arg0: i32, %arg1: i32, %arg2: memref<2xf32, #tpu.memory_space<smem>>) -> (i32, i32, i32) {
    %c0_i32 = arith.constant 0 : i32
    %c0_i32_0 = arith.constant 0 : i32
    %c0_i32_1 = arith.constant 0 : i32
    return %arg1, %c0_i32, %c0_i32_0 : i32, i32, i32
  }
  func.func @transform_2(%arg0: i32, %arg1: i32, %arg2: memref<2xf32, #tpu.memory_space<smem>>) -> (i32, i32) {
    %c0_i32 = arith.constant 0 : i32
    %c0_i32_0 = arith.constant 0 : i32
    %c0_i32_1 = arith.constant 0 : i32
    return %c0_i32, %c0_i32_0 : i32, i32
  }
  func.func @transform_3(%arg0: i32, %arg1: i32, %arg2: memref<2xf32, #tpu.memory_space<smem>>) -> (i32, i32) {
    %c0_i32 = arith.constant 0 : i32
    %c0_i32_0 = arith.constant 0 : i32
    %c0_i32_1 = arith.constant 0 : i32
    return %c0_i32, %c0_i32_0 : i32, i32
  }
  func.func @transform_4(%arg0: i32, %arg1: i32, %arg2: memref<2xf32, #tpu.memory_space<smem>>) -> (i32, i32) {
    %c0_i32 = arith.constant 0 : i32
    %c0_i32_0 = arith.constant 0 : i32
    return %arg0, %c0_i32 : i32, i32
  }
}

</mosaic_0001>

<llo_original>
// kernel: tpu_custom_call.1
$region0: #{tpu_custom_call.1}
  #allocation0 [shape = 'u32[]', space=smem, size = 0x4, offset = 0x4, fixed_abs, tag = 'smem constant byte address 0x4 - core index']
  #allocation1 [shape = 'u32[144,128]{1,0:T(1,128)}', space=vmem, size = 0x12000, scoped, tag = 'internal scratch']
  #allocation2 [shape = 'bf16[64,64]{1,0:T(16,128)(2,1)}', space=vmem, size = 0x4000, scoped, tag = 'scratch operand']
  #allocation3 [shape = 'f32[8,64]{1,0:T(8,128)}', space=vmem, size = 0x1000, scoped, tag = 'scratch operand']
  #allocation4 [shape = 's32[1]{0}', space=sflag, size = 0x4, scoped, tag = 'scoped memory for tpu_custom_call.1']
  #allocation5 [shape = 'u8[512]{0}', space=smem, size = 0x200, scoped, tag = 'prefetched SMEM operand 0']
  %s0 = inlined_call_operand.vmem [shape: f32[2], index: 0, kind: input, shape index: {}]
  %s1 = inlined_call_operand.vmem [shape: bf16[8,64], index: 1, kind: input, shape index: {}]
  %s2 = inlined_call_operand.vmem [shape: bf16[1,64,32], index: 2, kind: input, shape index: {}]
  %s3 = inlined_call_operand.vmem [shape: f32[1,32], index: 3, kind: input, shape index: {}]
  %s4 = inlined_call_operand.vmem [shape: f32[64,32], index: 4, kind: input, shape index: {}]
  %s5 = inlined_call_operand.hbm [shape: f32[8,32], index: 5, kind: output, shape index: {}]
  %s6 = sld [smem:[#allocation0]]
  $region34: #{tpu_custom_call.1} parent=0
    _
  %s8 = ssub.s32 1, %s6
  %s9 = scalar_select 0, %s8, %s6
  %s10 = sshll.u32 %s0, 4
  %s11 = int_to_ptr.vmem [resolvable:$true] %s10
  %13 = dma.vmem_to_smem %s11, 16, [#allocation5], [#allocation4]
  %14 = dma.done [#allocation4], 16
  %15 = sfence
  $region1: #{tpu_custom_call.1} parent=0
    #allocation6 [shape = 'u8[4096]{0}', space=vmem, size = 0x1000, scoped, tag = 'output window, operand 0, single buffered']
    #allocation7 [shape = 's32[1]{0}', space=sflag, size = 0x4, scoped, tag = 'scoped memory for tpu_custom_call.1']
    %16 = vsyncpa [#allocation7], 0
    // Predicated region
    $region2: #{tpu_custom_call.1} parent=1 // pred_check
      _
    $region3: #{tpu_custom_call.1} parent=1 // pred_check_branch
      %18 = sbr.rel (0) target = $region5
    $region4: #{tpu_custom_call.1} parent=1 // pred_region
      _
    $region5: #{tpu_custom_call.1} parent=1 // pred_fallthru
      _
    // Predicated region
    $region6: #{tpu_custom_call.1} parent=1 // pred_check
      _
    $region7: #{tpu_custom_call.1} parent=1 // pred_check_branch
      %20 = sbr.rel (0) target = $region9
    $region8: #{tpu_custom_call.1} parent=1 // pred_region
      _
    $region9: #{tpu_custom_call.1} parent=1 // pred_fallthru
      _
    // Predicated region
    $region10: #{tpu_custom_call.1} parent=1 // pred_check
      _
    $region11: #{tpu_custom_call.1} parent=1 // pred_check_branch
      %22 = sbr.rel (0) target = $region13
    $region12: #{tpu_custom_call.1} parent=1 // pred_region
      _
    $region13: #{tpu_custom_call.1} parent=1 // pred_fallthru
      _
    // Predicated region
    $region14: #{tpu_custom_call.1} parent=1 // pred_check
      _
    $region15: #{tpu_custom_call.1} parent=1 // pred_check_branch
      %24 = sbr.rel (0) target = $region17
    $region16: #{tpu_custom_call.1} parent=1 // pred_region
      _
    $region17: #{tpu_custom_call.1} parent=1 // pred_fallthru
      _
    %p26 = scmp.eq.s32.totalorder 0, 0
    // Predicated region
    $region18: #{tpu_custom_call.1} parent=1 // pred_check
      %p27 = pneg %p26
    $region19: #{tpu_custom_call.1} parent=1 // pred_check_branch
      %29 = sbr.rel (%p27) target = $region21
    $region20: #{tpu_custom_call.1} parent=1 // pred_region
      %vm30 = vcmask 523264
      %31 = vst.msk [vmem:[#allocation3] sm:$0xff] %vm30, 0.0
      %32 = vst.msk [vmem:[#allocation2] sm:$0xff] %vm30, 0
      %33 = vst.msk [vmem:[#allocation2 + $0x8] sm:$0xff] %vm30, 0
      %34 = vst.msk [vmem:[#allocation2 + $0x10] sm:$0xff] %vm30, 0
      %35 = vst.msk [vmem:[#allocation2 + $0x18] sm:$0xff] %vm30, 0
    $region21: #{tpu_custom_call.1} parent=1 // pred_fallthru
      _
    %v36 = vld [vmem:[%s2] sm:$0xf]
    %v37 = vld [vmem:[%s2 + $0x4] sm:$0xf]
    %v38 = vld [vmem:[%s2 + $0x8] sm:$0xf]
    %v39 = vld [vmem:[%s2 + $0xc] sm:$0xf]
    %v44 = vunpack.c.l.b16 %v36
    %v45 = vunpack.c.l.b16 %v37
    %v46 = vunpack.c.l.b16 %v38
    %v47 = vunpack.c.l.b16 %v39
    %v48 = vpack.c.b16 %v45, %v44
    %v49 = vpack.c.b16 %v47, %v46
    %vm52 = vcmask 261120
    %53 = vst.msk [vmem:[#allocation2] sm:$0xff] %vm52, %v48
    %54 = vst.msk [vmem:[#allocation2 + $0x8] sm:$0xff] %vm52, %v49
    %v55 = vld [vmem:[%s2 + $0x10] sm:$0xf]
    %v56 = vld [vmem:[%s2 + $0x14] sm:$0xf]
    %v57 = vld [vmem:[%s2 + $0x18] sm:$0xf]
    %v58 = vld [vmem:[%s2 + $0x1c] sm:$0xf]
    %v63 = vunpack.c.l.b16 %v55
    %v64 = vunpack.c.l.b16 %v56
    %v65 = vunpack.c.l.b16 %v57
    %v66 = vunpack.c.l.b16 %v58
    %v67 = vpack.c.b16 %v64, %v63
    %v68 = vpack.c.b16 %v66, %v65
    %69 = vrot.lane.b32.xlu0 %v67, 32
    %v70 = vpop.permute.xlu0 %69
    %71 = vrot.lane.b32.xlu0 %v68, 32
    %v72 = vpop.permute.xlu0 %71
    %vm75 = vcmask 523520
    %76 = vst.msk [vmem:[#allocation2 + $0x10] sm:$0xff] %vm75, %v70
    %77 = vst.msk [vmem:[#allocation2 + $0x18] sm:$0xff] %vm75, %v72
    %v78 = vld [vmem:[%s1] sm:$0xf]
    %v79 = vld [vmem:[#allocation2] sm:$0xff]
    %v80 = vld [vmem:[#allocation2 + $0x8] sm:$0xff]
    %v81 = vld [vmem:[#allocation2 + $0x10] sm:$0xff]
    %v82 = vld [vmem:[#allocation2 + $0x18] sm:$0xff]
    %vm83 = vcmask 523264
    %v85 = vsel %vm83, %v78, 0
    %87 = vmatprep.subr.bf16.mxu0 0
    %88 = vmatpush1.bf16.msra.mxu0 %v79
    %89 = vmatprep.subr.bf16.mxu0 0
    %90 = vmatpush1.bf16.msra.mxu0 %v80
    %91 = vmatprep.subr.bf16.mxu0 0
    %92 = vmatpush1.bf16.msra.mxu0 %v81
    %93 = vmatprep.subr.bf16.mxu0 0
    %94 = vmatpush1.bf16.msra.mxu0 %v82
    %95 = vmatprep.subr.bf16.mxu0 0
    %96 = vmatpush1.bf16.msra.mxu0 0
    %97 = vmatprep.subr.bf16.mxu0 0
    %98 = vmatpush1.bf16.msra.mxu0 0
    %99 = vmatprep.subr.bf16.mxu0 0
    %100 = vmatpush1.bf16.msra.mxu0 0
    %101 = vmatprep.subr.bf16.mxu0 0
    %102 = vmatpush1.bf16.msra.mxu0 0
    %103 = vmatprep.subr.bf16.mxu0 0
    %104 = vmatpush1.bf16.msra.mxu0 0
    %105 = vmatprep.subr.bf16.mxu0 0
    %106 = vmatpush1.bf16.msra.mxu0 0
    %107 = vmatprep.subr.bf16.mxu0 0
    %108 = vmatpush1.bf16.msra.mxu0 0
    %109 = vmatprep.subr.bf16.mxu0 0
    %110 = vmatpush1.bf16.msra.mxu0 0
    %111 = vmatprep.subr.bf16.mxu0 0
    %112 = vmatpush1.bf16.msra.mxu0 0
    %113 = vmatprep.subr.bf16.mxu0 0
    %114 = vmatpush1.bf16.msra.mxu0 0
    %115 = vmatprep.subr.bf16.mxu0 0
    %116 = vmatpush1.bf16.msra.mxu0 0
    %117 = vmatprep.subr.bf16.mxu0 0
    %118 = vmatpush1.bf16.msra.mxu0 0
    %119 = vmatprep.mubr.bf16.mxu0 0
    %120 = vmatmul.mubr.bf16.gmra.mrb[0].mxu0 %v85
    %v121 = vpop.f32.mrb[0].mxu0
    %v122 = vadd.f32 0.0, %v121
    %v123 = vpop.f32.mrb[0].mxu0
    %v124 = vpop.f32.mrb[0].mxu0
    %v125 = vpop.f32.mrb[0].mxu0
    %126 = vdwg.mxu0
    %s127 = sld [smem:[#allocation5]]
    %v128 = vld [vmem:[#allocation3] sm:$0xff]
    %v129 = vstv %s127
    %v130 = vmul.f32 %v122, %v129
    %v131 = vround.ne.pseudo %v130
    %v132 = vmax.f32 %v131, -7.0
    %v133 = vmin.f32 %v132, 7.0
    %v134 = vadd.f32 %v128, %v133
    %135 = vst.msk [vmem:[#allocation3] sm:$0xff] %vm83, %v134
    // Predicated region
    $region22: #{tpu_custom_call.1} parent=1 // pred_check
      %p136 = pneg %p26
    $region23: #{tpu_custom_call.1} parent=1 // pred_check_branch
      %138 = sbr.rel (%p136) target = $region25
    $region24: #{tpu_custom_call.1} parent=1 // pred_region
      %s139 = sld [smem:[#allocation5 + $0x1]]
      %v140 = vld [vmem:[#allocation3] sm:$0xff]
      %v141 = vld [vmem:[%s4] sm:$0xff]
      %v142 = vld [vmem:[%s4 + $0x8] sm:$0xff]
      %v143 = vld [vmem:[%s4 + $0x10] sm:$0xff]
      %v144 = vld [vmem:[%s4 + $0x18] sm:$0xff]
      %v145 = vld [vmem:[%s4 + $0x20] sm:$0xff]
      %v146 = vld [vmem:[%s4 + $0x28] sm:$0xff]
      %v147 = vld [vmem:[%s4 + $0x30] sm:$0xff]
      %v148 = vld [vmem:[%s4 + $0x38] sm:$0xff]
      %v150 = vsel %vm83, %v140, 0
      %152 = vmatprep.subr.mxu0 0.0
      %153 = vmatpush1.msra.mxu0 %v141
      %154 = vmatprep.subr.mxu0 0.0
      %155 = vmatpush1.msra.mxu0 %v142
      %156 = vmatprep.subr.mxu0 0.0
      %157 = vmatpush1.msra.mxu0 %v143
      %158 = vmatprep.subr.mxu0 0.0
      %159 = vmatpush1.msra.mxu0 %v144
      %160 = vmatprep.subr.mxu0 0.0
      %161 = vmatpush1.msra.mxu0 %v145
      %162 = vmatprep.subr.mxu0 0.0
      %163 = vmatpush1.msra.mxu0 %v146
      %164 = vmatprep.subr.mxu0 0.0
      %165 = vmatpush1.msra.mxu0 %v147
      %166 = vmatprep.subr.mxu0 0.0
      %167 = vmatpush1.msra.mxu0 %v148
      %168 = vmatprep.subr.mxu0 0.0
      %169 = vmatpush1.msra.mxu0 0.0
      %170 = vmatprep.subr.mxu0 0.0
      %171 = vmatpush1.msra.mxu0 0.0
      %172 = vmatprep.subr.mxu0 0.0
      %173 = vmatpush1.msra.mxu0 0.0
      %174 = vmatprep.subr.mxu0 0.0
      %175 = vmatpush1.msra.mxu0 0.0
      %176 = vmatprep.subr.mxu0 0.0
      %177 = vmatpush1.msra.mxu0 0.0
      %178 = vmatprep.subr.mxu0 0.0
      %179 = vmatpush1.msra.mxu0 0.0
      %180 = vmatprep.subr.mxu0 0.0
      %181 = vmatpush1.msra.mxu0 0.0
      %182 = vmatprep.subr.mxu0 0.0
      %183 = vmatpush1.msra.mxu0 0.0
      %184 = vmatprep.subr.mxu0 0.0
      %185 = vmatpush1.msra.mxu0 0.0
      %186 = vmatprep.subr.mxu0 0.0
      %187 = vmatpush1.msra.mxu0 0.0
      %188 = vmatprep.subr.mxu0 0.0
      %189 = vmatpush1.msra.mxu0 0.0
      %190 = vmatprep.subr.mxu0 0.0
      %191 = vmatpush1.msra.mxu0 0.0
      %192 = vmatprep.subr.mxu0 0.0
      %193 = vmatpush1.msra.mxu0 0.0
      %194 = vmatprep.subr.mxu0 0.0
      %195 = vmatpush1.msra.mxu0 0.0
      %196 = vmatprep.subr.mxu0 0.0
      %197 = vmatpush1.msra.mxu0 0.0
      %198 = vmatprep.subr.mxu0 0.0
      %199 = vmatpush1.msra.mxu0 0.0
      %200 = vmatprep.subr.mxu0 0.0
      %201 = vmatpush1.msra.mxu0 0.0
      %202 = vmatprep.subr.mxu0 0.0
      %203 = vmatpush1.msra.mxu0 0.0
      %204 = vmatprep.subr.mxu0 0.0
      %205 = vmatpush1.msra.mxu0 0.0
      %206 = vmatprep.subr.mxu0 0.0
      %207 = vmatpush1.msra.mxu0 0.0
      %208 = vmatprep.subr.mxu0 0.0
      %209 = vmatpush1.msra.mxu0 0.0
      %210 = vmatprep.subr.mxu0 0.0
      %211 = vmatpush1.msra.mxu0 0.0
      %212 = vmatprep.subr.mxu0 0.0
      %213 = vmatpush1.msra.mxu0 0.0
      %214 = vmatprep.subr.mxu0 0.0
      %215 = vmatpush1.msra.mxu0 0.0
      %216 = vmatprep.mubr.f32.mxu0 0.0
      %217 = vmatmul.mubr.f32.gmra.mrb[0].mxu0 %v150
      %v218 = vpop.f32.mrb[0].mxu0
      %v219 = vadd.f32 0.0, %v218
      %v220 = vpop.f32.mrb[0].mxu0
      %221 = vdwg.mxu0
      %v222 = vstv %s139
      %v223 = vmul.f32 %v219, %v222
      %v224 = vld [vmem:[%s3] sm:$0x1]
      %v226 = vlaneseq
      %v227 = vshrl.u32 %v226, 7
      %v228 = vsub.s32 0, %v227
      %v229 = vrot.slane %v224, %v228
      %v231 = vadd.f32 %v223, %v229
      %232 = vst.msk [vmem:[#allocation6] sm:$0xff] %vm52, %v231
    $region25: #{tpu_custom_call.1} parent=1 // pred_fallthru
      _
    // Predicated region
    $region26: #{tpu_custom_call.1} parent=1 // pred_check
      _
    $region27: #{tpu_custom_call.1} parent=1 // pred_check_branch
      %234 = sbr.rel (0) target = $region29
    $region28: #{tpu_custom_call.1} parent=1 // pred_region
      %s236 = ssub.s32 128, 128
      %237 = vsyncadd [#allocation7], %s236
      %s239 = sshll.u32 [#allocation6], 4
      %s240 = int_to_ptr.vmem [resolvable:$true] %s239
      %242 = dma.vmem_to_hbm [thread:$0]  %s240, 128, %s5, [#allocation7]
    $region29: #{tpu_custom_call.1} parent=1 // pred_fallthru
      _
    // Predicated region
    $region30: #{tpu_custom_call.1} parent=1 // pred_check
      _
    $region31: #{tpu_custom_call.1} parent=1 // pred_check_branch
      %244 = sbr.rel (0) target = $region33
    $region32: #{tpu_custom_call.1} parent=1 // pred_region
      %245 = dma.done [#allocation7], 128
    $region33: #{tpu_custom_call.1} parent=1 // pred_fallthru
      _
    %246 = vsyncpa [#allocation7], 1

</llo_original>
